<compile_context>
chip_gen: v7x
topology: tpu7x:2x2x1
jax: 0.10.0
libtpu: 0.0.40
codegen_flags: <defaults>
</compile_context>

<pallas_src>
import functools
import inspect
import math

import jax
import jax.numpy as jnp
from jax.experimental import pallas as pl
from jax.experimental.pallas import tpu as pltpu

_LANE = 128


def _round_up(x, m):
    return ((x + m - 1) // m) * m


def _cdiv(a, b):
    return -(-a // b)


def _supports_buffered():
    if not hasattr(pl, "Buffered"):
        return False
    try:
        return "pipeline_mode" in inspect.signature(pl.BlockSpec).parameters
    except Exception:
        return True


_HAS_BUFFERED = _supports_buffered()


def _vmem_capacity_bytes():
    try:
        return int(pltpu.get_tpu_info().vmem_capacity_bytes)
    except Exception:
        # Conservative fallback (v7x per-TensorCore physical VMEM).
        return 64 * 1024 * 1024


def _resident_spec(shape, index_map):
    """BlockSpec for a tile whose block index never changes over the grid."""
    if _HAS_BUFFERED:
        return pl.BlockSpec(shape, index_map, pipeline_mode=pl.Buffered(1))
    return pl.BlockSpec(shape, index_map)


# ----------------------------------------------------------------------------
# Kernels
# ----------------------------------------------------------------------------
def ffn_kernel_resident(x_ref, w1_ref, b1_ref, w2_ref, b2_ref, o_ref):
    # Whole W1/W2 resident in VMEM: single fused step, no accumulator.
    h = jnp.dot(x_ref[...], w1_ref[...], preferred_element_type=jnp.float32)
    h = jnp.maximum(h + b1_ref[...].astype(jnp.float32), 0.0)
    part = jnp.dot(h.astype(w2_ref.dtype), w2_ref[...],
                   preferred_element_type=jnp.float32)
    o_ref[...] = (part + b2_ref[...].astype(jnp.float32)).astype(o_ref.dtype)


def ffn_kernel_ktiled(x_ref, w1_ref, b1_ref, w2_ref, b2_ref, o_ref, acc_ref):
    # Hidden dim tiled (nk >= 2): accumulate partial second-matmul results in
    # an f32 scratch; the last k fuses (acc + part + b2) into the store.
    k = pl.program_id(1)
    last = pl.num_programs(1) - 1

    h = jnp.dot(x_ref[...], w1_ref[...], preferred_element_type=jnp.float32)
    h = jnp.maximum(h + b1_ref[...].astype(jnp.float32), 0.0)
    part = jnp.dot(h.astype(w2_ref.dtype), w2_ref[...],
                   preferred_element_type=jnp.float32)

    @pl.when(k == 0)
    def _():
        acc_ref[...] = part

    @pl.when(jnp.logical_and(k > 0, k < last))
    def _():
        acc_ref[...] += part

    @pl.when(k == last)
    def _():
        o_ref[...] = (acc_ref[...] + part
                      + b2_ref[...].astype(jnp.float32)).astype(o_ref.dtype)


# ----------------------------------------------------------------------------
# Parameter prep (one-time; hoist out of the per-call path)
# ----------------------------------------------------------------------------
def prepare_ffn_params(w1, b1, w2, b2, compute_dtype=None):
    """Pad (to lane multiples) and optionally cast the FFN parameters once.

    compute_dtype=jnp.bfloat16 is the fast path (MXU-native operands, f32
    accumulation); default None keeps the parameter dtypes untouched.
    """
    d_model, hidden = w1.shape
    hidden2, d_out = w2.shape
    assert hidden2 == hidden, "W2 must be (hidden, d_out)"

    dm_p = _round_up(d_model, _LANE)
    h_p = _round_up(hidden, _LANE)
    do_p = _round_up(d_out, _LANE)
    cdt = jnp.dtype(compute_dtype) if compute_dtype is not None else None

    def prep(a, pads):
        if cdt is not None and a.dtype != cdt:
            a = a.astype(cdt)
        if any(hi for _, hi in pads):
            a = jnp.pad(a, pads)
        return a

    w1p = prep(w1, ((0, dm_p - d_model), (0, h_p - hidden)))
    b1p = prep(jnp.reshape(b1, (1, hidden)), ((0, 0), (0, h_p - hidden)))
    w2p = prep(w2, ((0, h_p - hidden), (0, do_p - d_out)))
    b2p = prep(jnp.reshape(b2, (1, d_out)), ((0, 0), (0, do_p - d_out)))
    return w1p, b1p, w2p, b2p


# ----------------------------------------------------------------------------
# Apply (jit-friendly; d_out / tm / tk are static)
# ----------------------------------------------------------------------------
def ffn_apply(x, w1p, b1p, w2p, b2p, *, d_out, tm=None, tk=None):
    """relu(X @ W1 + b1) @ W2 + b2 for every position, using prepared params.

    x: (..., d_model).  Params must come from prepare_ffn_params.  Operands are
    cast to the prepared weight dtype; accumulation is f32; output keeps
    x.dtype.
    """
    out_dtype = x.dtype
    *lead, d_model = x.shape
    m = math.prod(lead) if lead else 1

    dm_p, hidden_p0 = w1p.shape
    do_p = w2p.shape[1]
    assert d_model <= dm_p and d_out <= do_p

    op_dtype = w1p.dtype
    x = x.astype(op_dtype)
    op_isz = jnp.dtype(op_dtype).itemsize
    out_isz = jnp.dtype(out_dtype).itemsize
    sub = 16 if op_isz < 4 else 8  # sublane packing for the operand dtype

    vmem_cap = _vmem_capacity_bytes()
    budget = int(0.72 * vmem_cap)  # ~46 MiB on v7x, ~92 MiB on v5e/v6e

    def step_vmem(tm_, tk_):
        resident = tk_ >= hidden_p0
        nbuf_w = 1 if (resident and _HAS_BUFFERED) else 2
        w_bytes = (dm_p * tk_ + tk_ * do_p + tk_ + do_p) * op_isz * nbuf_w
        x_bytes = tm_ * dm_p * op_isz * 2
        o_bytes = tm_ * do_p * out_isz * 2
        acc_bytes = 0 if resident else tm_ * do_p * 4
        h_bytes = tm_ * tk_ * 4
        return w_bytes + x_bytes + o_bytes + acc_bytes + h_bytes

    # ---- row tile ----
    tm_user = tm
    tm = 256 if tm is None else int(tm)
    tm = max(sub, _round_up(min(tm, _round_up(m, sub)), sub))
    # Split into >= 2 row tiles when possible so the "parallel" axis can shard
    # across megacore / v7x dual TensorCores.
    if tm_user is None and _round_up(m, tm) // tm < 2 and m > sub:
        tm = max(sub, _round_up(_cdiv(m, 2), sub))

    # ---- hidden (k) tile: resident if it fits, else balanced 128-aligned ----
    if tk is None:
        if step_vmem(tm, hidden_p0) <= budget:
            tk = hidden_p0
        else:
            lanes = hidden_p0 // _LANE
            nk_min = None
            for nk_cand in range(2, lanes + 1):
                if step_vmem(tm, _LANE * _cdiv(lanes, nk_cand)) <= budget:
                    nk_min = nk_cand
                    break
            if nk_min is None:
                nk_min = lanes
            tk = _LANE * _cdiv(lanes, nk_min)
            # Prefer an exact divisor near nk_min (no extra hidden padding).
            for nk_cand in range(nk_min, min(lanes, 2 * nk_min) + 1):
                if (lanes % nk_cand == 0
                        and step_vmem(tm, _LANE * (lanes // nk_cand)) <= budget):
                    tk = _LANE * (lanes // nk_cand)
                    break
    tk = max(_LANE, min(_round_up(int(tk), _LANE), hidden_p0))

    hidden_p = _round_up(hidden_p0, tk)
    if hidden_p != hidden_p0:
        # TODO(synk): re-padding weights here defeats param-prep hoisting; only
        # hit when no balanced 128-aligned tile divides hidden_p0 within budget.
        w1p = jnp.pad(w1p, ((0, 0), (0, hidden_p - hidden_p0)))
        b1p = jnp.pad(b1p, ((0, 0), (0, hidden_p - hidden_p0)))
        w2p = jnp.pad(w2p, ((0, hidden_p - hidden_p0), (0, 0)))
    nk = hidden_p // tk

    # Non-resident weights: larger row tiles halve HBM weight re-streaming,
    # provided they still fit the budget and keep >= 2 row tiles.
    if tm_user is None and nk > 1:
        cand_tm = max(sub, _round_up(min(512, _round_up(m, sub)), sub))
        if (cand_tm > tm and _round_up(m, cand_tm) // cand_tm >= 2
                and step_vmem(cand_tm, tk) <= budget):
            tm = cand_tm

    m_pad = _round_up(m, tm)

    # ---- pad X ----
    x2d = x.reshape(m, d_model)
    pad_r, pad_c = m_pad - m, dm_p - d_model
    if pad_r or pad_c:
        x2d = jnp.pad(x2d, ((0, pad_r), (0, pad_c)))

    cost = pl.CostEstimate(
        flops=2 * m_pad * hidden_p * (dm_p + do_p),
        transcendentals=0,
        bytes_accessed=int(x2d.size * op_isz
                           + (w1p.size + b1p.size + w2p.size + b2p.size) * op_isz
                           + m_pad * do_p * out_isz))

    vmem_limit = int(min(max(1.2 * step_vmem(tm, tk), 16 * 1024 * 1024),
                         0.9 * vmem_cap))

    if nk == 1:
        grid_spec = pltpu.PrefetchScalarGridSpec(
            num_scalar_prefetch=0,
            grid=(m_pad // tm,),
            in_specs=[
                pl.BlockSpec((tm, dm_p), lambda i: (i, 0)),       # X row tile
                _resident_spec((dm_p, tk), lambda i: (0, 0)),     # W1 (resident)
                _resident_spec((1, tk), lambda i: (0, 0)),        # b1
                _resident_spec((tk, do_p), lambda i: (0, 0)),     # W2 (resident)
                _resident_spec((1, do_p), lambda i: (0, 0)),      # b2
            ],
            out_specs=pl.BlockSpec((tm, do_p), lambda i: (i, 0)),
        )
        call = pl.pallas_call(
            ffn_kernel_resident,
            out_shape=jax.ShapeDtypeStruct((m_pad, do_p), out_dtype),
            grid_spec=grid_spec,
            compiler_params=pltpu.CompilerParams(
                dimension_semantics=("parallel",),
                vmem_limit_bytes=vmem_limit),
            cost_estimate=cost,
        )
    else:
        grid_spec = pltpu.PrefetchScalarGridSpec(
            num_scalar_prefetch=0,
            grid=(m_pad // tm, nk),
            in_specs=[
                pl.BlockSpec((tm, dm_p), lambda i, k: (i, 0)),    # X row tile
                pl.BlockSpec((dm_p, tk), lambda i, k: (0, k)),    # W1 k-tile
                pl.BlockSpec((1, tk), lambda i, k: (0, k)),       # b1 k-tile
                pl.BlockSpec((tk, do_p), lambda i, k: (k, 0)),    # W2 k-tile
                _resident_spec((1, do_p), lambda i, k: (0, 0)),   # b2
            ],
            out_specs=pl.BlockSpec((tm, do_p), lambda i, k: (i, 0)),
            scratch_shapes=[pltpu.VMEM((tm, do_p), jnp.float32)],
        )
        call = pl.pallas_call(
            ffn_kernel_ktiled,
            out_shape=jax.ShapeDtypeStruct((m_pad, do_p), out_dtype),
            grid_spec=grid_spec,
            compiler_params=pltpu.CompilerParams(
                dimension_semantics=("parallel", "arbitrary"),
                vmem_limit_bytes=vmem_limit),
            cost_estimate=cost,
        )

    out2d = call(x2d, w1p, b1p, w2p, b2p)
    return out2d[:m, :d_out].reshape(*lead, d_out)


def position_wise_ffn(x, w1, b1, w2, b2, *, tm=None, tk=None,
                      compute_dtype=None):
    """Convenience wrapper: prepares params per call, then applies the kernel.

    For repeated calls, hoist prepare_ffn_params out and jit ffn_apply.
    compute_dtype=jnp.bfloat16 is the MXU-native fast path (f32 accumulation).
    """
    params = prepare_ffn_params(w1, b1, w2, b2, compute_dtype)
    return ffn_apply(x, *params, d_out=w2.shape[1], tm=tm, tk=tk)


# ----------------------------------------------------------------------------
# Reference, init, test
# ----------------------------------------------------------------------------
def ffn_reference(x, w1, b1, w2, b2, dtype=None):
    """Plain-JAX reference with the same operand-dtype / f32-accum policy."""
    cd = jnp.dtype(dtype) if dtype is not None else jnp.dtype(x.dtype)
    d_model = x.shape[-1]
    x2 = x.reshape(-1, d_model).astype(cd)
    h = jnp.dot(x2, w1.astype(cd), preferred_element_type=jnp.float32)
    h = jnp.maximum(h + b1.reshape(1, -1).astype(cd).astype(jnp.float32), 0.0)
    o = jnp.dot(h.astype(cd), w2.astype(cd), preferred_element_type=jnp.float32)
    o = o + b2.reshape(1, -1).astype(cd).astype(jnp.float32)
    return o.reshape(*x.shape[:-1], w2.shape[1]).astype(x.dtype)


def init_ffn_params(key, d_model, ffn_num_hiddens, ffn_num_outputs,
                    dtype=jnp.float32):
    """Deterministic init mimicking torch.nn.Linear (U[-1/sqrt(fan_in), +])."""
    k1, k2, k3, k4 = jax.random.split(key, 4)
    bound1 = 1.0 / math.sqrt(d_model)
    bound2 = 1.0 / math.sqrt(ffn_num_hiddens)
    # stored pre-transposed: (in, out)
    w1 = jax.random.uniform(k1, (d_model, ffn_num_hiddens), dtype,
                            minval=-bound1, maxval=bound1)
    b1 = jax.random.uniform(k2, (1, ffn_num_hiddens), dtype,
                            minval=-bound1, maxval=bound1)
    w2 = jax.random.uniform(k3, (ffn_num_hiddens, ffn_num_outputs), dtype,
                            minval=-bound2, maxval=bound2)
    b2 = jax.random.uniform(k4, (1, ffn_num_outputs), dtype,
                            minval=-bound2, maxval=bound2)
    return w1, b1, w2, b2


if __name__ == "__main__":
    batch, seq, d_model = 2, 8, 16
    ffn_num_hiddens, ffn_num_outputs = 32, 16

    key = jax.random.PRNGKey(0)
    kx, kp = jax.random.split(key)
    x = jax.random.normal(kx, (batch, seq, d_model), jnp.float32)
    w1, b1, w2, b2 = init_ffn_params(kp, d_model, ffn_num_hiddens,
                                     ffn_num_outputs)
    ref = ffn_reference(x, w1, b1, w2, b2)

    # --- hoisted param prep + jitted apply (intended production path) ---
    params_f32 = prepare_ffn_params(w1, b1, w2, b2)
    apply_fn = jax.jit(functools.partial(ffn_apply, d_out=ffn_num_outputs))
    out = jax.block_until_ready(apply_fn(x, *params_f32))
    assert out.shape == (batch, seq, ffn_num_outputs)
    assert jnp.allclose(out, ref, atol=1e-5, rtol=1e-5), float(
        jnp.max(jnp.abs(out - ref)))

    # --- bf16 operand fast path (f32 accumulation, output stays f32) ---
    params_bf16 = prepare_ffn_params(w1, b1, w2, b2,
                                     compute_dtype=jnp.bfloat16)
    out_bf16 = jax.block_until_ready(apply_fn(x, *params_bf16))
    ref_bf16 = ffn_reference(x, w1, b1, w2, b2, dtype=jnp.bfloat16)
    assert out_bf16.shape == (batch, seq, ffn_num_outputs)
    assert jnp.allclose(out_bf16, ref_bf16, atol=1e-2, rtol=1e-2), float(
        jnp.max(jnp.abs(out_bf16 - ref_bf16)))

    # --- convenience (un-hoisted) wrapper also matches ---
    out2 = jax.block_until_ready(position_wise_ffn(x, w1, b1, w2, b2))
    assert jnp.allclose(out2, ref, atol=1e-5, rtol=1e-5), float(
        jnp.max(jnp.abs(out2 - ref)))

    print("KERNEL_OK")
</pallas_src>

<mosaic_0001>
module attributes {stable_mosaic.version = 11 : i64} {
  func.func @ffn_kernel_resident(%arg0: i32, %arg1: memref<8x128xf32, #tpu.memory_space<vmem>>, %arg2: memref<128x128xf32, #tpu.memory_space<vmem>>, %arg3: memref<1x128xf32, #tpu.memory_space<vmem>>, %arg4: memref<128x128xf32, #tpu.memory_space<vmem>>, %arg5: memref<1x128xf32, #tpu.memory_space<vmem>>, %arg6: memref<8x128xf32, #tpu.memory_space<vmem>>) attributes {dimension_semantics = [#tpu.dimension_semantics<parallel>], iteration_bounds = array<i64: 2>, scalar_prefetch = 0 : i64, scratch_operands = 0 : i64, tpu.core_type = #tpu.core_type<tc>, window_params = [{transform_indices = @transform_0, window_bounds = array<i64: 8, 128>}, {pipeline_mode = #tpu.pipeline_mode<synchronous>, transform_indices = @transform_1, window_bounds = array<i64: 128, 128>}, {pipeline_mode = #tpu.pipeline_mode<synchronous>, transform_indices = @transform_2, window_bounds = array<i64: 1, 128>}, {pipeline_mode = #tpu.pipeline_mode<synchronous>, transform_indices = @transform_3, window_bounds = array<i64: 128, 128>}, {pipeline_mode = #tpu.pipeline_mode<synchronous>, transform_indices = @transform_4, window_bounds = array<i64: 1, 128>}, {transform_indices = @transform_5, window_bounds = array<i64: 8, 128>}]} {
    %c0 = arith.constant 0 : index
    %c0_0 = arith.constant 0 : index
    %0 = vector.load %arg1[%c0, %c0_0] : memref<8x128xf32, #tpu.memory_space<vmem>>, vector<8x128xf32>
    %c0_1 = arith.constant 0 : index
    %c0_2 = arith.constant 0 : index
    %1 = vector.load %arg2[%c0_1, %c0_2] : memref<128x128xf32, #tpu.memory_space<vmem>>, vector<128x128xf32>
    %cst = arith.constant dense<0.000000e+00> : vector<8x128xf32>
    %2 = tpu.matmul %0, %1, %cst {dimension_numbers = #tpu.dot_dimension_numbers<[1], [0], [0], [1], [0, 0, 1, 1], [], []>} : vector<8x128xf32>, vector<128x128xf32>, vector<8x128xf32> -> vector<8x128xf32>
    %c0_3 = arith.constant 0 : index
    %c0_4 = arith.constant 0 : index
    %3 = vector.load %arg3[%c0_3, %c0_4] : memref<1x128xf32, #tpu.memory_space<vmem>>, vector<1x128xf32>
    %4 = vector.broadcast %3 : vector<1x128xf32> to vector<8x128xf32>
    %5 = arith.addf %2, %4 : vector<8x128xf32>
    %cst_5 = arith.constant 0.000000e+00 : f32
    %6 = vector.broadcast %cst_5 : f32 to vector<8x128xf32>
    %7 = arith.maximumf %5, %6 : vector<8x128xf32>
    %c0_6 = arith.constant 0 : index
    %c0_7 = arith.constant 0 : index
    %8 = vector.load %arg4[%c0_6, %c0_7] : memref<128x128xf32, #tpu.memory_space<vmem>>, vector<128x128xf32>
    %cst_8 = arith.constant dense<0.000000e+00> : vector<8x128xf32>
    %9 = tpu.matmul %7, %8, %cst_8 {dimension_numbers = #tpu.dot_dimension_numbers<[1], [0], [0], [1], [0, 0, 1, 1], [], []>} : vector<8x128xf32>, vector<128x128xf32>, vector<8x128xf32> -> vector<8x128xf32>
    %c0_9 = arith.constant 0 : index
    %c0_10 = arith.constant 0 : index
    %10 = vector.load %arg5[%c0_9, %c0_10] : memref<1x128xf32, #tpu.memory_space<vmem>>, vector<1x128xf32>
    %11 = vector.broadcast %10 : vector<1x128xf32> to vector<8x128xf32>
    %12 = arith.addf %9, %11 : vector<8x128xf32>
    %c0_11 = arith.constant 0 : index
    %c0_12 = arith.constant 0 : index
    %13 = vector.load %arg6[%c0_11, %c0_12] : memref<8x128xf32, #tpu.memory_space<vmem>>, vector<8x128xf32>
    tpu.vector_store %arg6[%c0_11, %c0_12], %12 {strides = array<i32>} : memref<8x128xf32, #tpu.memory_space<vmem>>, vector<8x128xf32>,
    return
  }
  func.func @transform_0(%arg0: i32) -> (i32, i32) {
    %c0_i32 = arith.constant 0 : i32
    %c0_i32_0 = arith.constant 0 : i32
    return %arg0, %c0_i32 : i32, i32
  }
  func.func @transform_1(%arg0: i32) -> (i32, i32) {
    %c0_i32 = arith.constant 0 : i32
    %c0_i32_0 = arith.constant 0 : i32
    %c0_i32_1 = arith.constant 0 : i32
    return %c0_i32, %c0_i32_0 : i32, i32
  }
  func.func @transform_2(%arg0: i32) -> (i32, i32) {
    %c0_i32 = arith.constant 0 : i32
    %c0_i32_0 = arith.constant 0 : i32
    %c0_i32_1 = arith.constant 0 : i32
    return %c0_i32, %c0_i32_0 : i32, i32
  }
  func.func @transform_3(%arg0: i32) -> (i32, i32) {
    %c0_i32 = arith.constant 0 : i32
    %c0_i32_0 = arith.constant 0 : i32
    %c0_i32_1 = arith.constant 0 : i32
    return %c0_i32, %c0_i32_0 : i32, i32
  }
  func.func @transform_4(%arg0: i32) -> (i32, i32) {
    %c0_i32 = arith.constant 0 : i32
    %c0_i32_0 = arith.constant 0 : i32
    %c0_i32_1 = arith.constant 0 : i32
    return %c0_i32, %c0_i32_0 : i32, i32
  }
  func.func @transform_5(%arg0: i32) -> (i32, i32) {
    %c0_i32 = arith.constant 0 : i32
    %c0_i32_0 = arith.constant 0 : i32
    return %arg0, %c0_i32 : i32, i32
  }
}

</mosaic_0001>

<llo_original>
// kernel: ffn_apply.1
$region0: #{ffn_apply.1}
  #allocation0 [shape = 'u32[]', space=smem, size = 0x4, offset = 0x4, fixed_abs, tag = 'smem constant byte address 0x4 - core index']
  #allocation1 [shape = 'u32[144,128]{1,0:T(1,128)}', space=vmem, size = 0x12000, scoped, tag = 'internal scratch']
  %s0 = inlined_call_operand.vmem [shape: f32[16,128], index: 0, kind: input, shape index: {}]
  %s1 = inlined_call_operand.hbm [shape: f32[128,128], index: 1, kind: input, shape index: {}]
  %s2 = inlined_call_operand.vmem [shape: f32[1,128], index: 2, kind: input, shape index: {}]
  %s3 = inlined_call_operand.hbm [shape: f32[128,128], index: 3, kind: input, shape index: {}]
  %s4 = inlined_call_operand.vmem [shape: f32[1,128], index: 4, kind: input, shape index: {}]
  %s5 = inlined_call_operand.vmem [shape: f32[16,128], index: 5, kind: output, shape index: {}]
  %s6 = sld [smem:[#allocation0]]
  $region61: #{ffn_apply.1} parent=0
    _
  %s8 = ssub.s32 1, %s6
  %s9 = scalar_select 0, %s8, %s6
  $region1: #{ffn_apply.1} parent=0
    #allocation2 [shape = 'u8[65536]{0}', space=vmem, size = 0x10000, scoped, tag = 'input window, operand 1, single buffered']
    #allocation3 [shape = 's32[2]{0}', space=sflag, size = 0x8, scoped, tag = 'scoped memory for ffn_apply.1']
    #allocation4 [shape = 'u8[65536]{0}', space=vmem, size = 0x10000, scoped, tag = 'input window, operand 3, single buffered']
    #allocation5 [shape = 's32[1]{0}', space=sflag, size = 0x4, scoped, tag = 'scoped memory for ffn_apply.1']
    %10 = vsyncpa [#allocation3], 0
    %11 = vsyncpa [#allocation5], 0
    loop: start=0, step=1, limit=4
    $region2: #{ffn_apply.1} parent=1 // loop_pre_header
      _
    $region3: #{ffn_apply.1} parent=1 // loop_header
      %s13 = sphi 0, %s17
      %p14 = scmp.ge.s32.totalorder %s13, 4
      %s23 = sphi 0, %s25
      %s26 = sphi 0, %s23
      %s27 = sphi 0, %s26
      %s43 = sphi 0, %s27
      %s47 = sphi 0, %s47
      %s49 = sphi 0, %s47
      %s50 = sphi 0, %s49
      %s64 = sphi 0, %s50
      %s68 = sphi 0, %s68
      %s70 = sphi 0, %s68
      %s71 = sphi 0, %s70
      %s85 = sphi 0, %s71
      %s89 = sphi 0, %s89
      %s91 = sphi 0, %s89
      %s92 = sphi 0, %s91
      %s106 = sphi 0, %s92
      %s110 = sphi 0, %s110
      %s112 = sphi 0, %s110
      %s113 = sphi 0, %s112
      %s127 = sphi 0, %s113
      %s133 = sphi 0, %s135
      %s136 = sphi 0, %s133
      %s137 = sphi 0, %s136
      %s153 = sphi 0, %s137
    $region4: #{ffn_apply.1} parent=1 // loop_header_branch
      %16 = sbr.rel (%p14) target = $region8
    $region5: #{ffn_apply.1} parent=1 // loop_body
      %s18 = ssub.s32 %s13, 1
      %s19 = ssub.s32 %s13, 2
      %s20 = sadd.s32 %s13, 1
      %s21 = ssub.s32 %s13, %s20
      %p22 = scmp.eq.s32.totalorder %s21, 0
      %s24 = sadd.s32 %s23, 1
      %s25 = scalar_select %p22, %s23, %s24
      %p28 = pneg %p22
      %p29 = scmp.eq.s32.totalorder %s13, 1
      %p30 = por %p28, %p29
      %p31 = scmp.ne.s32.totalorder %s23, %s26
      %p32 = scmp.eq.s32.totalorder %s13, 0
      %p33 = por %p31, %p32
      %p34 = scmp.ne.s32.totalorder %s23, %s26
      %p35 = scmp.eq.s32.totalorder %s18, 1
      %p36 = por %p34, %p35
      %p37 = scmp.ne.s32.totalorder %s26, %s27
      %p38 = scmp.eq.s32.totalorder %s18, 0
      %p39 = por %p37, %p38
      %p40 = scmp.ne.s32.totalorder %s26, %s27
      %p41 = scmp.eq.s32.totalorder %s19, 1
      %p42 = por %p40, %p41
      %p44 = scmp.ne.s32.totalorder %s27, %s43
      %p45 = scmp.eq.s32.totalorder %s19, 0
      %p46 = por %p44, %p45
      %s48 = sadd.s32 %s47, 1
      %p51 = scmp.eq.s32.totalorder %s13, 1
      %p52 = scmp.ne.s32.totalorder %s47, %s49
      %p53 = scmp.eq.s32.totalorder %s13, 0
      %p54 = por %p52, %p53
      %p55 = scmp.ne.s32.totalorder %s47, %s49
      %p56 = scmp.eq.s32.totalorder %s18, 1
      %p57 = por %p55, %p56
      %p58 = scmp.ne.s32.totalorder %s49, %s50
      %p59 = scmp.eq.s32.totalorder %s18, 0
      %p60 = por %p58, %p59
      %p61 = scmp.ne.s32.totalorder %s49, %s50
      %p62 = scmp.eq.s32.totalorder %s19, 1
      %p63 = por %p61, %p62
      %p65 = scmp.ne.s32.totalorder %s50, %s64
      %p66 = scmp.eq.s32.totalorder %s19, 0
      %p67 = por %p65, %p66
      %s69 = sadd.s32 %s68, 1
      %p72 = scmp.eq.s32.totalorder %s13, 1
      %p73 = scmp.ne.s32.totalorder %s68, %s70
      %p74 = scmp.eq.s32.totalorder %s13, 0
      %p75 = por %p73, %p74
      %p76 = scmp.ne.s32.totalorder %s68, %s70
      %p77 = scmp.eq.s32.totalorder %s18, 1
      %p78 = por %p76, %p77
      %p79 = scmp.ne.s32.totalorder %s70, %s71
      %p80 = scmp.eq.s32.totalorder %s18, 0
      %p81 = por %p79, %p80
      %p82 = scmp.ne.s32.totalorder %s70, %s71
      %p83 = scmp.eq.s32.totalorder %s19, 1
      %p84 = por %p82, %p83
      %p86 = scmp.ne.s32.totalorder %s71, %s85
      %p87 = scmp.eq.s32.totalorder %s19, 0
      %p88 = por %p86, %p87
      %s90 = sadd.s32 %s89, 1
      %p93 = scmp.eq.s32.totalorder %s13, 1
      %p94 = scmp.ne.s32.totalorder %s89, %s91
      %p95 = scmp.eq.s32.totalorder %s13, 0
      %p96 = por %p94, %p95
      %p97 = scmp.ne.s32.totalorder %s89, %s91
      %p98 = scmp.eq.s32.totalorder %s18, 1
      %p99 = por %p97, %p98
      %p100 = scmp.ne.s32.totalorder %s91, %s92
      %p101 = scmp.eq.s32.totalorder %s18, 0
      %p102 = por %p100, %p101
      %p103 = scmp.ne.s32.totalorder %s91, %s92
      %p104 = scmp.eq.s32.totalorder %s19, 1
      %p105 = por %p103, %p104
      %p107 = scmp.ne.s32.totalorder %s92, %s106
      %p108 = scmp.eq.s32.totalorder %s19, 0
      %p109 = por %p107, %p108
      %s111 = sadd.s32 %s110, 1
      %p114 = scmp.eq.s32.totalorder %s13, 1
      %p115 = scmp.ne.s32.totalorder %s110, %s112
      %p116 = scmp.eq.s32.totalorder %s13, 0
      %p117 = por %p115, %p116
      %p118 = scmp.ne.s32.totalorder %s110, %s112
      %p119 = scmp.eq.s32.totalorder %s18, 1
      %p120 = por %p118, %p119
      %p121 = scmp.ne.s32.totalorder %s112, %s113
      %p122 = scmp.eq.s32.totalorder %s18, 0
      %p123 = por %p121, %p122
      %p124 = scmp.ne.s32.totalorder %s112, %s113
      %p125 = scmp.eq.s32.totalorder %s19, 1
      %p126 = por %p124, %p125
      %p128 = scmp.ne.s32.totalorder %s113, %s127
      %p129 = scmp.eq.s32.totalorder %s19, 0
      %p130 = por %p128, %p129
      %s131 = ssub.s32 %s13, %s20
      %p132 = scmp.eq.s32.totalorder %s131, 0
      %s134 = sadd.s32 %s133, 1
      %s135 = scalar_select %p132, %s133, %s134
      %p138 = pneg %p132
      %p139 = scmp.eq.s32.totalorder %s13, 1
      %p140 = por %p138, %p139
      %p141 = scmp.ne.s32.totalorder %s133, %s136
      %p142 = scmp.eq.s32.totalorder %s13, 0
      %p143 = por %p141, %p142
      %p144 = scmp.ne.s32.totalorder %s133, %s136
      %p145 = scmp.eq.s32.totalorder %s18, 1
      %p146 = por %p144, %p145
      %p147 = scmp.ne.s32.totalorder %s136, %s137
      %p148 = scmp.eq.s32.totalorder %s18, 0
      %p149 = por %p147, %p148
      %p150 = scmp.ne.s32.totalorder %s136, %s137
      %p151 = scmp.eq.s32.totalorder %s19, 1
      %p152 = por %p150, %p151
      %p154 = scmp.ne.s32.totalorder %s137, %s153
      %p155 = scmp.eq.s32.totalorder %s19, 0
      %p156 = por %p154, %p155
      %p157 = scmp.le.s32.totalorder 1, %s13
      %p158 = scmp.lt.s32.totalorder %s13, 3
      %p159 = pnand %p157, %p158
      %p160 = pneg %p159
      // Predicated region
      $region9: #{ffn_apply.1} parent=5 // pred_check
        _
      $region10: #{ffn_apply.1} parent=5 // pred_check_branch
        %162 = sbr.rel (%p159) target = $region12
      $region11: #{ffn_apply.1} parent=5 // pred_region
        %s163 = ssub.s32 %s13, 1
        // Predicated region
        $region13: #{ffn_apply.1} parent=11 // pred_check
          %p164 = pneg %p60
        $region14: #{ffn_apply.1} parent=11 // pred_check_branch
          %166 = sbr.rel (%p164) target = $region16
        $region15: #{ffn_apply.1} parent=11 // pred_region
          %s168 = ssub.s32 2048, 2048
          %169 = vsyncadd [#allocation3], %s168
          %s170 = sshll.u32 [#allocation2], 4
          %s171 = int_to_ptr.vmem [resolvable:$true] %s170
          %176 = dma.hbm_to_vmem [thread:$0]  %s1, 2048, %s171, [#allocation3], 128, 128, 8
        $region16: #{ffn_apply.1} parent=11 // pred_fallthru
          _
        // Predicated region
        $region17: #{ffn_apply.1} parent=11 // pred_check
          %p177 = pneg %p81
        $region18: #{ffn_apply.1} parent=11 // pred_check_branch
          %179 = sbr.rel (%p177) target = $region20
        $region19: #{ffn_apply.1} parent=11 // pred_region
          _
        $region20: #{ffn_apply.1} parent=11 // pred_fallthru
          _
        // Predicated region
        $region21: #{ffn_apply.1} parent=11 // pred_check
          %p180 = pneg %p102
        $region22: #{ffn_apply.1} parent=11 // pred_check_branch
          %182 = sbr.rel (%p180) target = $region24
        $region23: #{ffn_apply.1} parent=11 // pred_region
          %s184 = ssub.s32 2048, 2048
          %185 = vsyncadd [#allocation5], %s184
          %s186 = sshll.u32 [#allocation4], 4
          %s187 = int_to_ptr.vmem [resolvable:$true] %s186
          %192 = dma.hbm_to_vmem [thread:$0]  %s3, 2048, %s187, [#allocation5], 128, 128, 8
        $region24: #{ffn_apply.1} parent=11 // pred_fallthru
          _
        // Predicated region
        $region25: #{ffn_apply.1} parent=11 // pred_check
          %p193 = pneg %p123
        $region26: #{ffn_apply.1} parent=11 // pred_check_branch
          %195 = sbr.rel (%p193) target = $region28
        $region27: #{ffn_apply.1} parent=11 // pred_region
          _
        $region28: #{ffn_apply.1} parent=11 // pred_fallthru
          _
      $region12: #{ffn_apply.1} parent=5 // pred_fallthru
        _
      %p196 = scmp.lt.s32.totalorder %s13, 2
      // Predicated region
      $region29: #{ffn_apply.1} parent=5 // pred_check
        %p197 = pneg %p196
      $region30: #{ffn_apply.1} parent=5 // pred_check_branch
        %199 = sbr.rel (%p197) target = $region32
      $region31: #{ffn_apply.1} parent=5 // pred_region
        // Predicated region
        $region33: #{ffn_apply.1} parent=31 // pred_check
          %p200 = pneg %p33
        $region34: #{ffn_apply.1} parent=31 // pred_check_branch
          %202 = sbr.rel (%p200) target = $region36
        $region35: #{ffn_apply.1} parent=31 // pred_region
          %p203 = scmp.lt.s32.totalorder %s13, 1
          %s204 = scalar_select %p203, %s13, 1
          %s205 = smul.addr %s204, 8
          %s206 = scalar_lea.vmem %s0, %s205
        $region36: #{ffn_apply.1} parent=31 // pred_fallthru
          _
      $region32: #{ffn_apply.1} parent=5 // pred_fallthru
        _
      %p207 = scmp.le.s32.totalorder 1, %s13
      %p208 = scmp.lt.s32.totalorder %s13, 3
      %p209 = pnand %p207, %p208
      %p210 = pneg %p209
      // Predicated region
      $region37: #{ffn_apply.1} parent=5 // pred_check
        _
      $region38: #{ffn_apply.1} parent=5 // pred_check_branch
        %212 = sbr.rel (%p209) target = $region40
      $region39: #{ffn_apply.1} parent=5 // pred_region
        %s213 = ssub.s32 %s13, 1
        // Predicated region
        $region41: #{ffn_apply.1} parent=39 // pred_check
          %p214 = pneg %p60
        $region42: #{ffn_apply.1} parent=39 // pred_check_branch
          %216 = sbr.rel (%p214) target = $region44
        $region43: #{ffn_apply.1} parent=39 // pred_region
          %217 = dma.done [#allocation3], 2048
        $region44: #{ffn_apply.1} parent=39 // pred_fallthru
          _
        // Predicated region
        $region45: #{ffn_apply.1} parent=39 // pred_check
          %p218 = pneg %p102
        $region46: #{ffn_apply.1} parent=39 // pred_check_branch
          %220 = sbr.rel (%p218) target = $region48
        $region47: #{ffn_apply.1} parent=39 // pred_region
          %221 = dma.done [#allocation5], 2048
        $region48: #{ffn_apply.1} parent=39 // pred_fallthru
          _
        %p222 = scmp.lt.s32.totalorder %s18, 1
        %s223 = scalar_select %p222, %s18, 1
        %s224 = smul.addr %s223, 8
        %s225 = scalar_lea.vmem %s0, %s224
        %p226 = pneg %p39
        %p227 = pneg %p36
        %p228 = pneg %p60
        %p229 = pneg %p57
        %p230 = pneg %p81
        %p231 = pneg %p78
        %p232 = pneg %p102
        %p233 = pneg %p99
        %p234 = pneg %p123
        %p235 = pneg %p120
        %p236 = pneg %p149
        %p237 = pneg %p146
        %p238 = scmp.lt.s32.totalorder %s18, 1
        %s239 = scalar_select %p238, %s18, 1
        %s240 = smul.addr %s239, 8
        %s241 = scalar_lea.vmem %s5, %s240
        %p242 = scmp.lt.s32.totalorder %s18, 1
        %s243 = scalar_select %p242, %s18, 1
        %s244 = smul.addr %s243, 8
        %s245 = scalar_lea.vmem %s0, %s244
        %p246 = scmp.lt.s32.totalorder %s18, 1
        %s247 = scalar_select %p246, %s18, 1
        %s248 = smul.addr %s247, 8
        %s249 = scalar_lea.vmem %s5, %s248
        %v250 = vld [vmem:[%s245] sm:$0xff]
        %v251 = vld [vmem:[#allocation2] sm:$0xff]
        %v252 = vld [vmem:[#allocation2 + $0x8] sm:$0xff]
        %v253 = vld [vmem:[#allocation2 + $0x10] sm:$0xff]
        %v254 = vld [vmem:[#allocation2 + $0x18] sm:$0xff]
        %v255 = vld [vmem:[#allocation2 + $0x20] sm:$0xff]
        %v256 = vld [vmem:[#allocation2 + $0x28] sm:$0xff]
        %v257 = vld [vmem:[#allocation2 + $0x30] sm:$0xff]
        %v258 = vld [vmem:[#allocation2 + $0x38] sm:$0xff]
        %v259 = vld [vmem:[#allocation2 + $0x40] sm:$0xff]
        %v260 = vld [vmem:[#allocation2 + $0x48] sm:$0xff]
        %v261 = vld [vmem:[#allocation2 + $0x50] sm:$0xff]
        %v262 = vld [vmem:[#allocation2 + $0x58] sm:$0xff]
        %v263 = vld [vmem:[#allocation2 + $0x60] sm:$0xff]
        %v264 = vld [vmem:[#allocation2 + $0x68] sm:$0xff]
        %v265 = vld [vmem:[#allocation2 + $0x70] sm:$0xff]
        %v266 = vld [vmem:[#allocation2 + $0x78] sm:$0xff]
        %v267 = vld [vmem:[%s2] sm:$0x1]
        %v269 = vlaneseq
        %v270 = vshrl.u32 %v269, 7
        %v271 = vsub.s32 0, %v270
        %v272 = vrot.slane %v267, %v271
        %274 = vmatprep.subr.mxu0 0.0
        %275 = vmatpush1.msra.mxu0 %v251
        %276 = vmatprep.subr.mxu0 0.0
        %277 = vmatpush1.msra.mxu0 %v252
        %278 = vmatprep.subr.mxu0 0.0
        %279 = vmatpush1.msra.mxu0 %v253
        %280 = vmatprep.subr.mxu0 0.0
        %281 = vmatpush1.msra.mxu0 %v254
        %282 = vmatprep.subr.mxu0 0.0
        %283 = vmatpush1.msra.mxu0 %v255
        %284 = vmatprep.subr.mxu0 0.0
        %285 = vmatpush1.msra.mxu0 %v256
        %286 = vmatprep.subr.mxu0 0.0
        %287 = vmatpush1.msra.mxu0 %v257
        %288 = vmatprep.subr.mxu0 0.0
        %289 = vmatpush1.msra.mxu0 %v258
        %290 = vmatprep.subr.mxu0 0.0
        %291 = vmatpush1.msra.mxu0 %v259
        %292 = vmatprep.subr.mxu0 0.0
        %293 = vmatpush1.msra.mxu0 %v260
        %294 = vmatprep.subr.mxu0 0.0
        %295 = vmatpush1.msra.mxu0 %v261
        %296 = vmatprep.subr.mxu0 0.0
        %297 = vmatpush1.msra.mxu0 %v262
        %298 = vmatprep.subr.mxu0 0.0
        %299 = vmatpush1.msra.mxu0 %v263
        %300 = vmatprep.subr.mxu0 0.0
        %301 = vmatpush1.msra.mxu0 %v264
        %302 = vmatprep.subr.mxu0 0.0
        %303 = vmatpush1.msra.mxu0 %v265
        %304 = vmatprep.subr.mxu0 0.0
        %305 = vmatpush1.msra.mxu0 %v266
        %306 = vmatprep.subr.mxu0 0.0
        %307 = vmatpush1.msra.mxu0 0.0
        %308 = vmatprep.subr.mxu0 0.0
        %309 = vmatpush1.msra.mxu0 0.0
        %310 = vmatprep.subr.mxu0 0.0
        %311 = vmatpush1.msra.mxu0 0.0
        %312 = vmatprep.subr.mxu0 0.0
        %313 = vmatpush1.msra.mxu0 0.0
        %314 = vmatprep.subr.mxu0 0.0
        %315 = vmatpush1.msra.mxu0 0.0
        %316 = vmatprep.subr.mxu0 0.0
        %317 = vmatpush1.msra.mxu0 0.0
        %318 = vmatprep.subr.mxu0 0.0
        %319 = vmatpush1.msra.mxu0 0.0
        %320 = vmatprep.subr.mxu0 0.0
        %321 = vmatpush1.msra.mxu0 0.0
        %322 = vmatprep.subr.mxu0 0.0
        %323 = vmatpush1.msra.mxu0 0.0
        %324 = vmatprep.subr.mxu0 0.0
        %325 = vmatpush1.msra.mxu0 0.0
        %326 = vmatprep.subr.mxu0 0.0
        %327 = vmatpush1.msra.mxu0 0.0
        %328 = vmatprep.subr.mxu0 0.0
        %329 = vmatpush1.msra.mxu0 0.0
        %330 = vmatprep.subr.mxu0 0.0
        %331 = vmatpush1.msra.mxu0 0.0
        %332 = vmatprep.subr.mxu0 0.0
        %333 = vmatpush1.msra.mxu0 0.0
        %334 = vmatprep.subr.mxu0 0.0
        %335 = vmatpush1.msra.mxu0 0.0
        %336 = vmatprep.subr.mxu0 0.0
        %337 = vmatpush1.msra.mxu0 0.0
        %338 = vmatprep.mubr.f32.mxu0 0.0
        %339 = vmatmul.mubr.f32.gmra.mrb[0].mxu0 %v250
        %v340 = vpop.f32.mrb[0].mxu0
        %v341 = vadd.f32 %v272, %v340
        %v342 = vpop.f32.mrb[0].mxu0
        %343 = vdwg.mxu0
        %v344 = vmax.f32 %v341, 0.0
        %v345 = vld [vmem:[#allocation4] sm:$0xff]
        %v346 = vld [vmem:[#allocation4 + $0x8] sm:$0xff]
        %v347 = vld [vmem:[#allocation4 + $0x10] sm:$0xff]
        %v348 = vld [vmem:[#allocation4 + $0x18] sm:$0xff]
        %v349 = vld [vmem:[#allocation4 + $0x20] sm:$0xff]
        %v350 = vld [vmem:[#allocation4 + $0x28] sm:$0xff]
        %v351 = vld [vmem:[#allocation4 + $0x30] sm:$0xff]
        %v352 = vld [vmem:[#allocation4 + $0x38] sm:$0xff]
        %v353 = vld [vmem:[#allocation4 + $0x40] sm:$0xff]
        %v354 = vld [vmem:[#allocation4 + $0x48] sm:$0xff]
        %v355 = vld [vmem:[#allocation4 + $0x50] sm:$0xff]
        %v356 = vld [vmem:[#allocation4 + $0x58] sm:$0xff]
        %v357 = vld [vmem:[#allocation4 + $0x60] sm:$0xff]
        %v358 = vld [vmem:[#allocation4 + $0x68] sm:$0xff]
        %v359 = vld [vmem:[#allocation4 + $0x70] sm:$0xff]
        %v360 = vld [vmem:[#allocation4 + $0x78] sm:$0xff]
        %v361 = vld [vmem:[%s4] sm:$0x1]
        %v363 = vlaneseq
        %v364 = vshrl.u32 %v363, 7
        %v365 = vsub.s32 0, %v364
        %v366 = vrot.slane %v361, %v365
        %368 = vmatprep.subr.mxu0 0.0
        %369 = vmatpush1.msra.mxu0 %v345
        %370 = vmatprep.subr.mxu0 0.0
        %371 = vmatpush1.msra.mxu0 %v346
        %372 = vmatprep.subr.mxu0 0.0
        %373 = vmatpush1.msra.mxu0 %v347
        %374 = vmatprep.subr.mxu0 0.0
        %375 = vmatpush1.msra.mxu0 %v348
        %376 = vmatprep.subr.mxu0 0.0
        %377 = vmatpush1.msra.mxu0 %v349
        %378 = vmatprep.subr.mxu0 0.0
        %379 = vmatpush1.msra.mxu0 %v350
        %380 = vmatprep.subr.mxu0 0.0
        %381 = vmatpush1.msra.mxu0 %v351
        %382 = vmatprep.subr.mxu0 0.0
        %383 = vmatpush1.msra.mxu0 %v352
        %384 = vmatprep.subr.mxu0 0.0
        %385 = vmatpush1.msra.mxu0 %v353
        %386 = vmatprep.subr.mxu0 0.0
        %387 = vmatpush1.msra.mxu0 %v354
        %388 = vmatprep.subr.mxu0 0.0
        %389 = vmatpush1.msra.mxu0 %v355
        %390 = vmatprep.subr.mxu0 0.0
        %391 = vmatpush1.msra.mxu0 %v356
        %392 = vmatprep.subr.mxu0 0.0
        %393 = vmatpush1.msra.mxu0 %v357
        %394 = vmatprep.subr.mxu0 0.0
        %395 = vmatpush1.msra.mxu0 %v358
        %396 = vmatprep.subr.mxu0 0.0
        %397 = vmatpush1.msra.mxu0 %v359
        %398 = vmatprep.subr.mxu0 0.0
        %399 = vmatpush1.msra.mxu0 %v360
        %400 = vmatprep.subr.mxu0 0.0
        %401 = vmatpush1.msra.mxu0 0.0
        %402 = vmatprep.subr.mxu0 0.0
        %403 = vmatpush1.msra.mxu0 0.0
        %404 = vmatprep.subr.mxu0 0.0
        %405 = vmatpush1.msra.mxu0 0.0
        %406 = vmatprep.subr.mxu0 0.0
        %407 = vmatpush1.msra.mxu0 0.0
        %408 = vmatprep.subr.mxu0 0.0
        %409 = vmatpush1.msra.mxu0 0.0
        %410 = vmatprep.subr.mxu0 0.0
        %411 = vmatpush1.msra.mxu0 0.0
        %412 = vmatprep.subr.mxu0 0.0
        %413 = vmatpush1.msra.mxu0 0.0
        %414 = vmatprep.subr.mxu0 0.0
        %415 = vmatpush1.msra.mxu0 0.0
        %416 = vmatprep.subr.mxu0 0.0
        %417 = vmatpush1.msra.mxu0 0.0
        %418 = vmatprep.subr.mxu0 0.0
        %419 = vmatpush1.msra.mxu0 0.0
        %420 = vmatprep.subr.mxu0 0.0
        %421 = vmatpush1.msra.mxu0 0.0
        %422 = vmatprep.subr.mxu0 0.0
        %423 = vmatpush1.msra.mxu0 0.0
        %424 = vmatprep.subr.mxu0 0.0
        %425 = vmatpush1.msra.mxu0 0.0
        %426 = vmatprep.subr.mxu0 0.0
        %427 = vmatpush1.msra.mxu0 0.0
        %428 = vmatprep.subr.mxu0 0.0
        %429 = vmatpush1.msra.mxu0 0.0
        %430 = vmatprep.subr.mxu0 0.0
        %431 = vmatpush1.msra.mxu0 0.0
        %432 = vmatprep.mubr.f32.mxu0 0.0
        %433 = vmatmul.mubr.f32.gmra.mrb[0].mxu0 %v344
        %v434 = vpop.f32.mrb[0].mxu0
        %v435 = vadd.f32 %v366, %v434
        %v436 = vpop.f32.mrb[0].mxu0
        %437 = vdwg.mxu0
        %438 = vst [vmem:[%s249] sm:$0xff] %v435
        %p439 = scmp.lt.s32.totalorder %s18, 1
        %s440 = scalar_select %p439, %s18, 1
        %s441 = smul.addr %s440, 8
        %s442 = scalar_lea.vmem %s5, %s441
        // Predicated region
        $region49: #{ffn_apply.1} parent=39 // pred_check
          %p443 = pneg %p146
        $region50: #{ffn_apply.1} parent=39 // pred_check_branch
          %445 = sbr.rel (%p443) target = $region52
        $region51: #{ffn_apply.1} parent=39 // pred_region
          _
        $region52: #{ffn_apply.1} parent=39 // pred_fallthru
          _
      $region40: #{ffn_apply.1} parent=5 // pred_fallthru
        _
      %p446 = scmp.le.s32.totalorder 2, %s13
      // Predicated region
      $region53: #{ffn_apply.1} parent=5 // pred_check
        %p447 = pneg %p446
      $region54: #{ffn_apply.1} parent=5 // pred_check_branch
        %449 = sbr.rel (%p447) target = $region56
      $region55: #{ffn_apply.1} parent=5 // pred_region
        %s450 = ssub.s32 %s13, 2
        // Predicated region
        $region57: #{ffn_apply.1} parent=55 // pred_check
          %p451 = pneg %p152
        $region58: #{ffn_apply.1} parent=55 // pred_check_branch
          %453 = sbr.rel (%p451) target = $region60
        $region59: #{ffn_apply.1} parent=55 // pred_region
          %p454 = scmp.lt.s32.totalorder %s19, 1
          %s455 = scalar_select %p454, %s19, 1
          %s456 = smul.addr %s455, 8
          %s457 = scalar_lea.vmem %s5, %s456
        $region60: #{ffn_apply.1} parent=55 // pred_fallthru
          _
      $region56: #{ffn_apply.1} parent=5 // pred_fallthru
        _
    $region6: #{ffn_apply.1} parent=1 // loop_footer
      %s17 = sadd.s32 1, %s13
    $region7: #{ffn_apply.1} parent=1 // loop_footer_branch
      %12 = sbr.rel target = $region3
    $region8: #{ffn_apply.1} parent=1 // loop_exit
      _
    %458 = vsyncpa [#allocation3], 1
    %s459 = scalar_lea.sflag [#allocation3], 1
    %460 = vsyncpa %s459, 1
    %461 = vsyncpa [#allocation5], 1

</llo_original>
